<compile_context>
chip_gen: v5e
topology: v5e:2x2
jax: 0.10.0
libtpu: 0.0.40
codegen_flags: <defaults>
</compile_context>

<pallas_src>
import math

import jax
import jax.numpy as jnp
from jax.experimental import pallas as pl
from jax.experimental.pallas import tpu as pltpu


_H1 = 256          # fc1 width
_H2 = 128          # fc2 width
_HEAD = 25         # 1 + 3 + 7 + 13 + 1 fused head columns
_HEAD_PAD = 128    # lane-dense fused-head slab width


def _mlp1d_kernel(x_ref, w1_ref, b1_ref, w2_ref, b2_ref, wh_ref, bh_ref, o_ref):
    # x_ref: (TN, D) f32; w* bf16; b* f32; o_ref: (TN, 128) bf16 (raw logits).
    x = x_ref[...].astype(jnp.bfloat16)          # cast on VPU, hidden under MXU work
    h1 = jnp.dot(x, w1_ref[...], preferred_element_type=jnp.float32)
    h1 = jnp.maximum(h1 + b1_ref[...], 0.0)
    # TODO(synk): training-mode dropout (random mask) not implemented; eval-mode identity.
    h2 = jnp.dot(h1.astype(jnp.bfloat16), w2_ref[...],
                 preferred_element_type=jnp.float32)
    h2 = jnp.maximum(h2 + b2_ref[...], 0.0)
    z = jnp.dot(h2.astype(jnp.bfloat16), wh_ref[...],
                preferred_element_type=jnp.float32) + bh_ref[...]
    o_ref[...] = z.astype(o_ref.dtype)


def _pick_tile(n):
    """Choose (tile_rows, padded_rows) for the batch axis."""
    n8 = pl.cdiv(n, 8) * 8                 # sublane aligned
    if n8 <= 256:
        return n8, n8                      # tiny batch: single grid step
    # Large batch: 256..1024-row tiles; keep >=2 grid steps so v7x's two
    # TensorCores both get work and the x/out DMAs stay double-buffered.
    half = (n8 // 2) // 256 * 256
    tn = max(256, min(1024, half))
    n_pad = pl.cdiv(n8, tn) * tn
    return tn, n_pad


def make_params(key, input_channels=3, input_size=16,
                num_type_classes=3, num_size_classes=7, num_type_size_classes=13):
    """xavier_uniform weights, zero biases — matches initialize_weights(mode='xavier')."""
    D = input_channels * input_size
    ks = jax.random.split(key, 7)

    def xavier(k, fan_in, fan_out):
        lim = math.sqrt(6.0 / (fan_in + fan_out))
        return jax.random.uniform(k, (fan_in, fan_out), jnp.float32, -lim, lim)

    p = {}
    p["fc1w"] = xavier(ks[0], D, _H1)
    p["fc1b"] = jnp.zeros((_H1,), jnp.float32)
    p["fc2w"] = xavier(ks[1], _H1, _H2)
    p["fc2b"] = jnp.zeros((_H2,), jnp.float32)
    heads = [
        xavier(ks[2], _H2, 1),                      # fc_check
        xavier(ks[3], _H2, num_type_classes),       # fc_type
        xavier(ks[4], _H2, num_size_classes),       # fc_size_cls
        xavier(ks[5], _H2, num_type_size_classes),  # fc_type_size
        xavier(ks[6], _H2, 1),                      # fc_size_reg
    ]
    p["head_w"] = jnp.concatenate(heads, axis=1)    # (128, 25)
    p["head_b"] = jnp.zeros((_HEAD,), jnp.float32)
    return p


@jax.jit
def mlp1d_forward(x, params):
    """x: (N, C_in, L) float32 — same layout the PyTorch module takes."""
    N = x.shape[0]
    D = x.shape[1] * x.shape[2]
    xf = x.reshape(N, D).astype(jnp.float32)        # == torch x.view(N, -1)

    tn, n_pad = _pick_tile(N)
    if n_pad != N:
        xf = jnp.pad(xf, ((0, n_pad - N), (0, 0)))

    w1 = params["fc1w"].astype(jnp.bfloat16)
    w2 = params["fc2w"].astype(jnp.bfloat16)
    wh = jnp.pad(params["head_w"],
                 ((0, 0), (0, _HEAD_PAD - _HEAD))).astype(jnp.bfloat16)
    b1 = params["fc1b"].reshape(1, _H1).astype(jnp.float32)
    b2 = params["fc2b"].reshape(1, _H2).astype(jnp.float32)
    bh = jnp.pad(params["head_b"].reshape(1, _HEAD),
                 ((0, 0), (0, _HEAD_PAD - _HEAD))).astype(jnp.float32)

    fixed = lambda shape: pl.BlockSpec(shape, lambda i: (0, 0))
    slab = pl.pallas_call(
        _mlp1d_kernel,
        out_shape=jax.ShapeDtypeStruct((n_pad, _HEAD_PAD), jnp.bfloat16),
        grid_spec=pltpu.PrefetchScalarGridSpec(
            num_scalar_prefetch=0,
            grid=(n_pad // tn,),
            in_specs=[
                pl.BlockSpec((tn, D), lambda i: (i, 0)),        # x: tiled over batch
                fixed((D, _H1)), fixed((1, _H1)),               # fc1 (resident)
                fixed((_H1, _H2)), fixed((1, _H2)),             # fc2 (resident)
                fixed((_H2, _HEAD_PAD)), fixed((1, _HEAD_PAD)), # fused heads (resident)
            ],
            out_specs=pl.BlockSpec((tn, _HEAD_PAD), lambda i: (i, 0)),
        ),
        compiler_params=pltpu.CompilerParams(
            dimension_semantics=("parallel",)),
    )(xf, w1, b1, w2, b2, wh, bh)

    # Head activations on the already-sliced columns (cheap wrapper-side ops).
    z = slab[:N].astype(jnp.float32)
    return (
        jax.nn.sigmoid(z[:, 0:1]),    # out_check
        z[:, 1:4],                    # out_type
        z[:, 4:11],                   # out_size_cls
        z[:, 11:24],                  # out_type_size
        jax.nn.softplus(z[:, 24:25]), # out_size_reg
    )


def mlp1d_reference(x, params):
    """Pure-JAX f32 reference for correctness checking."""
    N = x.shape[0]
    xf = x.reshape(N, -1).astype(jnp.float32)
    h = jnp.maximum(xf @ params["fc1w"] + params["fc1b"], 0.0)
    h = jnp.maximum(h @ params["fc2w"] + params["fc2b"], 0.0)
    z = h @ params["head_w"] + params["head_b"]
    return (
        jax.nn.sigmoid(z[:, 0:1]),
        z[:, 1:4],
        z[:, 4:11],
        z[:, 11:24],
        jax.nn.softplus(z[:, 24:25]),
    )


if __name__ == "__main__":
    key = jax.random.PRNGKey(0)
    pkey, xkey1, xkey2 = jax.random.split(key, 3)

    C, L = 3, 16
    params = make_params(pkey, input_channels=C, input_size=L)

    # Small batch (single-tile path) and a >256 batch (multi-tile path).
    for N in (2, 300):
        x = jax.random.normal(jax.random.fold_in(xkey1, N), (N, C, L), jnp.float32)
        outs = jax.block_until_ready(mlp1d_forward(x, params))
        refs = mlp1d_reference(x, params)

        expected_shapes = [(N, 1), (N, 3), (N, 7), (N, 13), (N, 1)]
        for o, r, es in zip(outs, refs, expected_shapes):
            assert o.shape == es, (o.shape, es)
            # bf16 matmul operands + bf16 output slab -> ~1e-2 level differences
            # from the f32 reference are expected and covered by this tolerance.
            assert jnp.allclose(o, r, atol=3e-2, rtol=3e-2), (N, o, r)

    print("KERNEL_OK")
</pallas_src>

<mosaic_0001>
module attributes {stable_mosaic.version = 11 : i64} {
  func.func @_mlp1d_kernel(%arg0: i32, %arg1: memref<8x48xf32, #tpu.memory_space<vmem>>, %arg2: memref<48x256xbf16, #tpu.memory_space<vmem>>, %arg3: memref<1x256xf32, #tpu.memory_space<vmem>>, %arg4: memref<256x128xbf16, #tpu.memory_space<vmem>>, %arg5: memref<1x128xf32, #tpu.memory_space<vmem>>, %arg6: memref<128x128xbf16, #tpu.memory_space<vmem>>, %arg7: memref<1x128xf32, #tpu.memory_space<vmem>>, %arg8: memref<8x128xbf16, #tpu.memory_space<vmem>>) attributes {dimension_semantics = [#tpu.dimension_semantics<parallel>], iteration_bounds = array<i64: 1>, scalar_prefetch = 0 : i64, scratch_operands = 0 : i64, tpu.core_type = #tpu.core_type<tc>, window_params = [{transform_indices = @transform_0, window_bounds = array<i64: 8, 48>}, {pipeline_mode = #tpu.pipeline_mode<synchronous>, transform_indices = @transform_1, window_bounds = array<i64: 48, 256>}, {pipeline_mode = #tpu.pipeline_mode<synchronous>, transform_indices = @transform_2, window_bounds = array<i64: 1, 256>}, {pipeline_mode = #tpu.pipeline_mode<synchronous>, transform_indices = @transform_3, window_bounds = array<i64: 256, 128>}, {pipeline_mode = #tpu.pipeline_mode<synchronous>, transform_indices = @transform_4, window_bounds = array<i64: 1, 128>}, {pipeline_mode = #tpu.pipeline_mode<synchronous>, transform_indices = @transform_5, window_bounds = array<i64: 128, 128>}, {pipeline_mode = #tpu.pipeline_mode<synchronous>, transform_indices = @transform_6, window_bounds = array<i64: 1, 128>}, {transform_indices = @transform_7, window_bounds = array<i64: 8, 128>}]} {
    %c0 = arith.constant 0 : index
    %c0_0 = arith.constant 0 : index
    %0 = vector.load %arg1[%c0, %c0_0] : memref<8x48xf32, #tpu.memory_space<vmem>>, vector<8x48xf32>
    %1 = arith.truncf %0 : vector<8x48xf32> to vector<8x48xbf16>
    %c0_1 = arith.constant 0 : index
    %c0_2 = arith.constant 0 : index
    %2 = vector.load %arg2[%c0_1, %c0_2] : memref<48x256xbf16, #tpu.memory_space<vmem>>, vector<48x256xbf16>
    %cst = arith.constant dense<0.000000e+00> : vector<8x256xf32>
    %3 = tpu.matmul %1, %2, %cst {dimension_numbers = #tpu.dot_dimension_numbers<[1], [0], [0], [1], [0, 0, 1, 1], [], []>} : vector<8x48xbf16>, vector<48x256xbf16>, vector<8x256xf32> -> vector<8x256xf32>
    %c0_3 = arith.constant 0 : index
    %c0_4 = arith.constant 0 : index
    %4 = vector.load %arg3[%c0_3, %c0_4] : memref<1x256xf32, #tpu.memory_space<vmem>>, vector<1x256xf32>
    %5 = vector.broadcast %4 : vector<1x256xf32> to vector<8x256xf32>
    %6 = arith.addf %3, %5 : vector<8x256xf32>
    %cst_5 = arith.constant 0.000000e+00 : f32
    %7 = vector.broadcast %cst_5 : f32 to vector<8x256xf32>
    %8 = arith.maximumf %6, %7 : vector<8x256xf32>
    %9 = arith.truncf %8 : vector<8x256xf32> to vector<8x256xbf16>
    %c0_6 = arith.constant 0 : index
    %c0_7 = arith.constant 0 : index
    %10 = vector.load %arg4[%c0_6, %c0_7] : memref<256x128xbf16, #tpu.memory_space<vmem>>, vector<256x128xbf16>
    %cst_8 = arith.constant dense<0.000000e+00> : vector<8x128xf32>
    %11 = tpu.matmul %9, %10, %cst_8 {dimension_numbers = #tpu.dot_dimension_numbers<[1], [0], [0], [1], [0, 0, 1, 1], [], []>} : vector<8x256xbf16>, vector<256x128xbf16>, vector<8x128xf32> -> vector<8x128xf32>
    %c0_9 = arith.constant 0 : index
    %c0_10 = arith.constant 0 : index
    %12 = vector.load %arg5[%c0_9, %c0_10] : memref<1x128xf32, #tpu.memory_space<vmem>>, vector<1x128xf32>
    %13 = vector.broadcast %12 : vector<1x128xf32> to vector<8x128xf32>
    %14 = arith.addf %11, %13 : vector<8x128xf32>
    %cst_11 = arith.constant 0.000000e+00 : f32
    %15 = vector.broadcast %cst_11 : f32 to vector<8x128xf32>
    %16 = arith.maximumf %14, %15 : vector<8x128xf32>
    %17 = arith.truncf %16 : vector<8x128xf32> to vector<8x128xbf16>
    %c0_12 = arith.constant 0 : index
    %c0_13 = arith.constant 0 : index
    %18 = vector.load %arg6[%c0_12, %c0_13] : memref<128x128xbf16, #tpu.memory_space<vmem>>, vector<128x128xbf16>
    %cst_14 = arith.constant dense<0.000000e+00> : vector<8x128xf32>
    %19 = tpu.matmul %17, %18, %cst_14 {dimension_numbers = #tpu.dot_dimension_numbers<[1], [0], [0], [1], [0, 0, 1, 1], [], []>} : vector<8x128xbf16>, vector<128x128xbf16>, vector<8x128xf32> -> vector<8x128xf32>
    %c0_15 = arith.constant 0 : index
    %c0_16 = arith.constant 0 : index
    %20 = vector.load %arg7[%c0_15, %c0_16] : memref<1x128xf32, #tpu.memory_space<vmem>>, vector<1x128xf32>
    %21 = vector.broadcast %20 : vector<1x128xf32> to vector<8x128xf32>
    %22 = arith.addf %19, %21 : vector<8x128xf32>
    %23 = arith.truncf %22 : vector<8x128xf32> to vector<8x128xbf16>
    %c0_17 = arith.constant 0 : index
    %c0_18 = arith.constant 0 : index
    %24 = vector.load %arg8[%c0_17, %c0_18] : memref<8x128xbf16, #tpu.memory_space<vmem>>, vector<8x128xbf16>
    tpu.vector_store %arg8[%c0_17, %c0_18], %23 {strides = array<i32>} : memref<8x128xbf16, #tpu.memory_space<vmem>>, vector<8x128xbf16>,
    return
  }
  func.func @transform_0(%arg0: i32) -> (i32, i32) {
    %c0_i32 = arith.constant 0 : i32
    %c0_i32_0 = arith.constant 0 : i32
    return %arg0, %c0_i32 : i32, i32
  }
  func.func @transform_1(%arg0: i32) -> (i32, i32) {
    %c0_i32 = arith.constant 0 : i32
    %c0_i32_0 = arith.constant 0 : i32
    %c0_i32_1 = arith.constant 0 : i32
    return %c0_i32, %c0_i32_0 : i32, i32
  }
  func.func @transform_2(%arg0: i32) -> (i32, i32) {
    %c0_i32 = arith.constant 0 : i32
    %c0_i32_0 = arith.constant 0 : i32
    %c0_i32_1 = arith.constant 0 : i32
    return %c0_i32, %c0_i32_0 : i32, i32
  }
  func.func @transform_3(%arg0: i32) -> (i32, i32) {
    %c0_i32 = arith.constant 0 : i32
    %c0_i32_0 = arith.constant 0 : i32
    %c0_i32_1 = arith.constant 0 : i32
    return %c0_i32, %c0_i32_0 : i32, i32
  }
  func.func @transform_4(%arg0: i32) -> (i32, i32) {
    %c0_i32 = arith.constant 0 : i32
    %c0_i32_0 = arith.constant 0 : i32
    %c0_i32_1 = arith.constant 0 : i32
    return %c0_i32, %c0_i32_0 : i32, i32
  }
  func.func @transform_5(%arg0: i32) -> (i32, i32) {
    %c0_i32 = arith.constant 0 : i32
    %c0_i32_0 = arith.constant 0 : i32
    %c0_i32_1 = arith.constant 0 : i32
    return %c0_i32, %c0_i32_0 : i32, i32
  }
  func.func @transform_6(%arg0: i32) -> (i32, i32) {
    %c0_i32 = arith.constant 0 : i32
    %c0_i32_0 = arith.constant 0 : i32
    %c0_i32_1 = arith.constant 0 : i32
    return %c0_i32, %c0_i32_0 : i32, i32
  }
  func.func @transform_7(%arg0: i32) -> (i32, i32) {
    %c0_i32 = arith.constant 0 : i32
    %c0_i32_0 = arith.constant 0 : i32
    return %arg0, %c0_i32 : i32, i32
  }
}

</mosaic_0001>

<llo_original>
// kernel: mlp1d_forward.1
$region0: #{mlp1d_forward.1}
  #allocation0 [shape = 'u32[]', space=smem, size = 0x4, offset = 0x4, fixed_abs, tag = 'smem constant byte address 0x4 - core index']
  #allocation1 [shape = 'u32[72,128]{1,0:T(1,128)}', space=vmem, size = 0x9000, scoped, tag = 'internal scratch']
  %s0 = inlined_call_operand.vmem [shape: f32[8,48], index: 0, kind: input, shape index: {}]
  %s1 = inlined_call_operand.vmem [shape: bf16[48,256], index: 1, kind: input, shape index: {}]
  %s2 = inlined_call_operand.vmem [shape: f32[1,256], index: 2, kind: input, shape index: {}]
  %s3 = inlined_call_operand.vmem [shape: bf16[256,128], index: 3, kind: input, shape index: {}]
  %s4 = inlined_call_operand.vmem [shape: f32[1,128], index: 4, kind: input, shape index: {}]
  %s5 = inlined_call_operand.vmem [shape: bf16[128,128], index: 5, kind: input, shape index: {}]
  %s6 = inlined_call_operand.vmem [shape: f32[1,128], index: 6, kind: input, shape index: {}]
  %s7 = inlined_call_operand.vmem [shape: bf16[8,128], index: 7, kind: output, shape index: {}]
  %s8 = sld [smem:[#allocation0]]
  $region38: #{mlp1d_forward.1} parent=0
    _
  %s10 = ssub.s32 1, %s8
  %s11 = scalar_select 0, %s10, %s8
  // Predicated region
  $region2: #{mlp1d_forward.1} parent=0 // pred_check
    _
  $region3: #{mlp1d_forward.1} parent=0 // pred_check_branch
    %13 = sbr.rel (0) target = $region5
  $region4: #{mlp1d_forward.1} parent=0 // pred_region
    _
  $region5: #{mlp1d_forward.1} parent=0 // pred_fallthru
    _
  // Predicated region
  $region6: #{mlp1d_forward.1} parent=0 // pred_check
    _
  $region7: #{mlp1d_forward.1} parent=0 // pred_check_branch
    %15 = sbr.rel (0) target = $region9
  $region8: #{mlp1d_forward.1} parent=0 // pred_region
    _
  $region9: #{mlp1d_forward.1} parent=0 // pred_fallthru
    _
  // Predicated region
  $region10: #{mlp1d_forward.1} parent=0 // pred_check
    _
  $region11: #{mlp1d_forward.1} parent=0 // pred_check_branch
    %17 = sbr.rel (0) target = $region13
  $region12: #{mlp1d_forward.1} parent=0 // pred_region
    _
  $region13: #{mlp1d_forward.1} parent=0 // pred_fallthru
    _
  // Predicated region
  $region14: #{mlp1d_forward.1} parent=0 // pred_check
    _
  $region15: #{mlp1d_forward.1} parent=0 // pred_check_branch
    %19 = sbr.rel (0) target = $region17
  $region16: #{mlp1d_forward.1} parent=0 // pred_region
    _
  $region17: #{mlp1d_forward.1} parent=0 // pred_fallthru
    _
  // Predicated region
  $region18: #{mlp1d_forward.1} parent=0 // pred_check
    _
  $region19: #{mlp1d_forward.1} parent=0 // pred_check_branch
    %21 = sbr.rel (0) target = $region21
  $region20: #{mlp1d_forward.1} parent=0 // pred_region
    _
  $region21: #{mlp1d_forward.1} parent=0 // pred_fallthru
    _
  // Predicated region
  $region22: #{mlp1d_forward.1} parent=0 // pred_check
    _
  $region23: #{mlp1d_forward.1} parent=0 // pred_check_branch
    %23 = sbr.rel (0) target = $region25
  $region24: #{mlp1d_forward.1} parent=0 // pred_region
    _
  $region25: #{mlp1d_forward.1} parent=0 // pred_fallthru
    _
  // Predicated region
  $region26: #{mlp1d_forward.1} parent=0 // pred_check
    _
  $region27: #{mlp1d_forward.1} parent=0 // pred_check_branch
    %25 = sbr.rel (0) target = $region29
  $region28: #{mlp1d_forward.1} parent=0 // pred_region
    _
  $region29: #{mlp1d_forward.1} parent=0 // pred_fallthru
    _
  %v27 = vld [vmem:[%s0] sm:$0xff]
  %v28 = vpack.c.bf16 %v27, %v27
  %v29 = vld [vmem:[%s1] sm:$0xff]
  %v30 = vld [vmem:[%s1 + $0x8] sm:$0xff]
  %v31 = vld [vmem:[%s1 + $0x10] sm:$0xff]
  %v32 = vld [vmem:[%s1 + $0x18] sm:$0xff]
  %v33 = vld [vmem:[%s1 + $0x20] sm:$0xff]
  %v34 = vld [vmem:[%s1 + $0x28] sm:$0xff]
  %v35 = vld [vmem:[%s2] sm:$0x3]
  %v37 = vperm.slane %v35, 0
  %v38 = vperm.slane %v35, 1
  %v47 = vunpack.c.l.b16 %v29
  %v48 = vunpack.c.h.b16 %v29
  %v49 = vunpack.c.l.b16 %v30
  %v50 = vunpack.c.h.b16 %v30
  %v51 = vunpack.c.l.b16 %v31
  %v52 = vunpack.c.h.b16 %v31
  %v53 = vunpack.c.l.b16 %v32
  %v54 = vunpack.c.h.b16 %v32
  %v55 = vunpack.c.l.b16 %v33
  %v56 = vunpack.c.h.b16 %v33
  %v57 = vunpack.c.l.b16 %v34
  %v58 = vunpack.c.h.b16 %v34
  %v59 = vpack.c.b16 %v49, %v47
  %v60 = vpack.c.b16 %v50, %v48
  %v61 = vpack.c.b16 %v53, %v51
  %v62 = vpack.c.b16 %v54, %v52
  %v63 = vpack.c.b16 %v57, %v55
  %v64 = vpack.c.b16 %v58, %v56
  %vm71 = vcmask 392192
  %v73 = vsel %vm71, %v28, 0
  %75 = vmatpush.bf16.msra.mxu0 0
  %76 = vmatpush.bf16.msra.mxu0 0
  %77 = vmatpush.bf16.msra.mxu0 0
  %78 = vmatpush.bf16.msra.mxu0 0
  %79 = vmatpush.bf16.msra.mxu0 0
  %80 = vmatpush.bf16.msra.mxu0 %v63
  %81 = vmatpush.bf16.msra.mxu0 %v61
  %82 = vmatpush.bf16.msra.mxu0 %v59
  %83 = vmatmul.bf16.gmra.mxu0 %v73
  %v84 = vpop.f32.mrf.mxu0
  %v85 = vadd.f32 %v37, %v84
  %v86 = vpop.f32.mrf.mxu0
  %87 = vdwg.mxu0
  %88 = vmatpush.bf16.msra.mxu0 0
  %89 = vmatpush.bf16.msra.mxu0 0
  %90 = vmatpush.bf16.msra.mxu0 0
  %91 = vmatpush.bf16.msra.mxu0 0
  %92 = vmatpush.bf16.msra.mxu0 0
  %93 = vmatpush.bf16.msra.mxu0 %v64
  %94 = vmatpush.bf16.msra.mxu0 %v62
  %95 = vmatpush.bf16.msra.mxu0 %v60
  %96 = vmatmul.bf16.gmra.mxu0 %v73
  %v97 = vpop.f32.mrf.mxu0
  %v98 = vadd.f32 %v38, %v97
  %v99 = vpop.f32.mrf.mxu0
  %100 = vdwg.mxu0
  %v101 = vmax.f32 %v85, 0.0
  %v102 = vmax.f32 %v98, 0.0
  %v103 = vpack.c.bf16 %v101, %v101
  %v104 = vpack.c.bf16 %v102, %v102
  %v105 = vld [vmem:[%s3] sm:$0xf]
  %v106 = vld [vmem:[%s3 + $0x4] sm:$0xf]
  %v107 = vld [vmem:[%s3 + $0x8] sm:$0xf]
  %v108 = vld [vmem:[%s3 + $0xc] sm:$0xf]
  %v109 = vld [vmem:[%s3 + $0x10] sm:$0xf]
  %v110 = vld [vmem:[%s3 + $0x14] sm:$0xf]
  %v111 = vld [vmem:[%s3 + $0x18] sm:$0xf]
  %v112 = vld [vmem:[%s3 + $0x1c] sm:$0xf]
  %v113 = vld [vmem:[%s3 + $0x20] sm:$0xf]
  %v114 = vld [vmem:[%s3 + $0x24] sm:$0xf]
  %v115 = vld [vmem:[%s3 + $0x28] sm:$0xf]
  %v116 = vld [vmem:[%s3 + $0x2c] sm:$0xf]
  %v117 = vld [vmem:[%s3 + $0x30] sm:$0xf]
  %v118 = vld [vmem:[%s3 + $0x34] sm:$0xf]
  %v119 = vld [vmem:[%s3 + $0x38] sm:$0xf]
  %v120 = vld [vmem:[%s3 + $0x3c] sm:$0xf]
  %v121 = vld [vmem:[%s3 + $0x40] sm:$0xf]
  %v122 = vld [vmem:[%s3 + $0x44] sm:$0xf]
  %v123 = vld [vmem:[%s3 + $0x48] sm:$0xf]
  %v124 = vld [vmem:[%s3 + $0x4c] sm:$0xf]
  %v125 = vld [vmem:[%s3 + $0x50] sm:$0xf]
  %v126 = vld [vmem:[%s3 + $0x54] sm:$0xf]
  %v127 = vld [vmem:[%s3 + $0x58] sm:$0xf]
  %v128 = vld [vmem:[%s3 + $0x5c] sm:$0xf]
  %v129 = vld [vmem:[%s3 + $0x60] sm:$0xf]
  %v130 = vld [vmem:[%s3 + $0x64] sm:$0xf]
  %v131 = vld [vmem:[%s3 + $0x68] sm:$0xf]
  %v132 = vld [vmem:[%s3 + $0x6c] sm:$0xf]
  %v133 = vld [vmem:[%s3 + $0x70] sm:$0xf]
  %v134 = vld [vmem:[%s3 + $0x74] sm:$0xf]
  %v135 = vld [vmem:[%s3 + $0x78] sm:$0xf]
  %v136 = vld [vmem:[%s3 + $0x7c] sm:$0xf]
  %v137 = vld [vmem:[%s4] sm:$0x1]
  %v139 = vperm.slane %v137, 0
  %v173 = vunpack.c.l.b16 %v105
  %v174 = vunpack.c.l.b16 %v106
  %v175 = vunpack.c.l.b16 %v107
  %v176 = vunpack.c.l.b16 %v108
  %v177 = vunpack.c.l.b16 %v109
  %v178 = vunpack.c.l.b16 %v110
  %v179 = vunpack.c.l.b16 %v111
  %v180 = vunpack.c.l.b16 %v112
  %v181 = vunpack.c.l.b16 %v113
  %v182 = vunpack.c.l.b16 %v114
  %v183 = vunpack.c.l.b16 %v115
  %v184 = vunpack.c.l.b16 %v116
  %v185 = vunpack.c.l.b16 %v117
  %v186 = vunpack.c.l.b16 %v118
  %v187 = vunpack.c.l.b16 %v119
  %v188 = vunpack.c.l.b16 %v120
  %v189 = vunpack.c.l.b16 %v121
  %v190 = vunpack.c.l.b16 %v122
  %v191 = vunpack.c.l.b16 %v123
  %v192 = vunpack.c.l.b16 %v124
  %v193 = vunpack.c.l.b16 %v125
  %v194 = vunpack.c.l.b16 %v126
  %v195 = vunpack.c.l.b16 %v127
  %v196 = vunpack.c.l.b16 %v128
  %v197 = vunpack.c.l.b16 %v129
  %v198 = vunpack.c.l.b16 %v130
  %v199 = vunpack.c.l.b16 %v131
  %v200 = vunpack.c.l.b16 %v132
  %v201 = vunpack.c.l.b16 %v133
  %v202 = vunpack.c.l.b16 %v134
  %v203 = vunpack.c.l.b16 %v135
  %v204 = vunpack.c.l.b16 %v136
  %v205 = vpack.c.b16 %v174, %v173
  %v206 = vpack.c.b16 %v176, %v175
  %v207 = vpack.c.b16 %v178, %v177
  %v208 = vpack.c.b16 %v180, %v179
  %v209 = vpack.c.b16 %v182, %v181
  %v210 = vpack.c.b16 %v184, %v183
  %v211 = vpack.c.b16 %v186, %v185
  %v212 = vpack.c.b16 %v188, %v187
  %v213 = vpack.c.b16 %v190, %v189
  %v214 = vpack.c.b16 %v192, %v191
  %v215 = vpack.c.b16 %v194, %v193
  %v216 = vpack.c.b16 %v196, %v195
  %v217 = vpack.c.b16 %v198, %v197
  %v218 = vpack.c.b16 %v200, %v199
  %v219 = vpack.c.b16 %v202, %v201
  %v220 = vpack.c.b16 %v204, %v203
  %237 = vmatpush.bf16.msra.mxu0 %v212
  %238 = vmatpush.bf16.msra.mxu0 %v211
  %239 = vmatpush.bf16.msra.mxu0 %v210
  %240 = vmatpush.bf16.msra.mxu0 %v209
  %241 = vmatpush.bf16.msra.mxu0 %v208
  %242 = vmatpush.bf16.msra.mxu0 %v207
  %243 = vmatpush.bf16.msra.mxu0 %v206
  %244 = vmatpush.bf16.msra.mxu0 %v205
  %245 = vmatmul.bf16.gmra.mxu0 %v103
  %v246 = vpop.f32.mrf.mxu0
  %v247 = vadd.f32 %v139, %v246
  %v248 = vpop.f32.mrf.mxu0
  %249 = vdwg.mxu0
  %250 = vmatpush.bf16.msra.mxu0 %v220
  %251 = vmatpush.bf16.msra.mxu0 %v219
  %252 = vmatpush.bf16.msra.mxu0 %v218
  %253 = vmatpush.bf16.msra.mxu0 %v217
  %254 = vmatpush.bf16.msra.mxu0 %v216
  %255 = vmatpush.bf16.msra.mxu0 %v215
  %256 = vmatpush.bf16.msra.mxu0 %v214
  %257 = vmatpush.bf16.msra.mxu0 %v213
  %258 = vmatmul.bf16.gmra.mxu0 %v104
  %v259 = vpop.f32.mrf.mxu0
  %v260 = vadd.f32 %v247, %v259
  %v261 = vpop.f32.mrf.mxu0
  %262 = vdwg.mxu0
  %v263 = vmax.f32 %v260, 0.0
  %v264 = vpack.c.bf16 %v263, %v263
  %v265 = vld [vmem:[%s5] sm:$0xf]
  %v266 = vld [vmem:[%s5 + $0x4] sm:$0xf]
  %v267 = vld [vmem:[%s5 + $0x8] sm:$0xf]
  %v268 = vld [vmem:[%s5 + $0xc] sm:$0xf]
  %v269 = vld [vmem:[%s5 + $0x10] sm:$0xf]
  %v270 = vld [vmem:[%s5 + $0x14] sm:$0xf]
  %v271 = vld [vmem:[%s5 + $0x18] sm:$0xf]
  %v272 = vld [vmem:[%s5 + $0x1c] sm:$0xf]
  %v273 = vld [vmem:[%s5 + $0x20] sm:$0xf]
  %v274 = vld [vmem:[%s5 + $0x24] sm:$0xf]
  %v275 = vld [vmem:[%s5 + $0x28] sm:$0xf]
  %v276 = vld [vmem:[%s5 + $0x2c] sm:$0xf]
  %v277 = vld [vmem:[%s5 + $0x30] sm:$0xf]
  %v278 = vld [vmem:[%s5 + $0x34] sm:$0xf]
  %v279 = vld [vmem:[%s5 + $0x38] sm:$0xf]
  %v280 = vld [vmem:[%s5 + $0x3c] sm:$0xf]
  %v281 = vld [vmem:[%s6] sm:$0x1]
  %v283 = vperm.slane %v281, 0
  %v301 = vunpack.c.l.b16 %v265
  %v302 = vunpack.c.l.b16 %v266
  %v303 = vunpack.c.l.b16 %v267
  %v304 = vunpack.c.l.b16 %v268
  %v305 = vunpack.c.l.b16 %v269
  %v306 = vunpack.c.l.b16 %v270
  %v307 = vunpack.c.l.b16 %v271
  %v308 = vunpack.c.l.b16 %v272
  %v309 = vunpack.c.l.b16 %v273
  %v310 = vunpack.c.l.b16 %v274
  %v311 = vunpack.c.l.b16 %v275
  %v312 = vunpack.c.l.b16 %v276
  %v313 = vunpack.c.l.b16 %v277
  %v314 = vunpack.c.l.b16 %v278
  %v315 = vunpack.c.l.b16 %v279
  %v316 = vunpack.c.l.b16 %v280
  %v317 = vpack.c.b16 %v302, %v301
  %v318 = vpack.c.b16 %v304, %v303
  %v319 = vpack.c.b16 %v306, %v305
  %v320 = vpack.c.b16 %v308, %v307
  %v321 = vpack.c.b16 %v310, %v309
  %v322 = vpack.c.b16 %v312, %v311
  %v323 = vpack.c.b16 %v314, %v313
  %v324 = vpack.c.b16 %v316, %v315
  %333 = vmatpush.bf16.msra.mxu0 %v324
  %334 = vmatpush.bf16.msra.mxu0 %v323
  %335 = vmatpush.bf16.msra.mxu0 %v322
  %336 = vmatpush.bf16.msra.mxu0 %v321
  %337 = vmatpush.bf16.msra.mxu0 %v320
  %338 = vmatpush.bf16.msra.mxu0 %v319
  %339 = vmatpush.bf16.msra.mxu0 %v318
  %340 = vmatpush.bf16.msra.mxu0 %v317
  %341 = vmatmul.bf16.gmra.mxu0 %v264
  %v342 = vpop.f32.mrf.mxu0
  %v343 = vadd.f32 %v283, %v342
  %v344 = vpop.f32.mrf.mxu0
  %345 = vdwg.mxu0
  %v346 = vpack.c.bf16 %v343, %v343
  %347 = vst [vmem:[%s7] sm:$0xf] %v346
  // Predicated region
  $region30: #{mlp1d_forward.1} parent=0 // pred_check
    _
  $region31: #{mlp1d_forward.1} parent=0 // pred_check_branch
    %349 = sbr.rel (0) target = $region33
  $region32: #{mlp1d_forward.1} parent=0 // pred_region
    _
  $region33: #{mlp1d_forward.1} parent=0 // pred_fallthru
    _
  // Predicated region
  $region34: #{mlp1d_forward.1} parent=0 // pred_check
    _
  $region35: #{mlp1d_forward.1} parent=0 // pred_check_branch
    %351 = sbr.rel (0) target = $region37
  $region36: #{mlp1d_forward.1} parent=0 // pred_region
    _
  $region37: #{mlp1d_forward.1} parent=0 // pred_fallthru
    _

</llo_original>
